<compile_context>
chip_gen: v7x
topology: tpu7x:2x2x1
jax: 0.10.0
libtpu: 0.0.40
codegen_flags: <defaults>
</compile_context>

<pallas_src>
import functools
import math

import jax
import jax.numpy as jnp
from jax.experimental import pallas as pl
from jax.experimental.pallas import tpu as pltpu


def _layer_norm_kernel(x_ref, g_ref, b_ref, o_ref, *, eps, D, P):
    """One grid step = one (tm, P*D) lane-dense tile.

    Each physical row holds P logical rows of width D; each logical row is
    normalized over its own D lanes (torch.nn.LayerNorm semantics: biased
    variance, eps inside the sqrt, affine gamma/beta).
    """
    x = x_ref[...].astype(jnp.float32)           # (tm, P*D), math in f32
    g = g_ref[...].astype(jnp.float32)           # (1, P*D)  gamma tiled P times
    b = b_ref[...].astype(jnp.float32)           # (1, P*D)  beta  tiled P times

    chunks = []
    for c in range(P):                           # static unroll, P <= 16
        xc = x[:, c * D:(c + 1) * D] if P > 1 else x     # (tm, D)
        mean = jnp.mean(xc, axis=-1, keepdims=True)      # (tm, 1)
        cen = xc - mean                                  # shared with variance
        var = jnp.mean(cen * cen, axis=-1, keepdims=True)  # biased (torch)
        chunks.append(cen * jax.lax.rsqrt(var + eps))    # EUP rsqrt, no divide
    xn = chunks[0] if P == 1 else jnp.concatenate(chunks, axis=-1)

    o_ref[...] = (xn * g + b).astype(o_ref.dtype)


def _packing_factor(D, n_logical_rows):
    """P logical rows per physical row so the lane width P*D is a multiple of
    128 (full-lane loads/stores).  Falls back to P=1 if D is already a
    multiple of 128, if P would be unreasonably large, or if the row count is
    not divisible by P."""
    P = 128 // math.gcd(D, 128)
    if P == 1 or P > 16 or n_logical_rows % P != 0:
        return 1
    return P


def _pick_row_tile(n_rows, width, in_bytes, out_bytes,
                   vmem_budget=24 * 1024 * 1024, max_rows=1024):
    """Row tile from a VMEM budget.

    Live VMEM ~= double-buffered input block + double-buffered output block +
    ~2 f32 working copies inside the kernel:
        per row ~= width * (2*in_bytes + 2*out_bytes + 8) bytes.
    Capped at max_rows (512–1024-row f32 tiles already reach ~85% of the HBM
    roofline; bigger tiles only add latency and VMEM pressure).
    """
    per_row = width * (2 * in_bytes + 2 * out_bytes + 8)
    tm = min(max_rows, max(1, vmem_budget // per_row))
    if tm >= n_rows:
        return n_rows                      # whole array: full-dim block (legal)
    return max(32, (tm // 32) * 32)        # sublane-aligned (f32/bf16/int8)


def layer_normalization(z, gamma, beta, eps=1e-5):
    """y = LayerNorm(D)(z) over the last dim of z (B, S, D); same shape/dtype.

    The reference module's nn.Dropout(0.1) is identity in eval mode.
    """
    B, S, D = z.shape
    N = B * S
    P = _packing_factor(D, N)
    width = P * D
    n_rows = N // P

    x = z.reshape(n_rows, width)              # row-major: metadata-only reshape
    g = jnp.tile(gamma.reshape(1, D), (1, P))
    b = jnp.tile(beta.reshape(1, D), (1, P))

    tm = _pick_row_tile(n_rows, width, x.dtype.itemsize, z.dtype.itemsize)
    grid = (pl.cdiv(n_rows, tm),)             # ragged last block handled by Pallas

    kernel = functools.partial(_layer_norm_kernel, eps=float(eps), D=D, P=P)

    out = pl.pallas_call(
        kernel,
        grid=grid,
        in_specs=[
            pl.BlockSpec((tm, width), lambda i: (i, 0)),   # row tile (pipelined)
            pl.BlockSpec((1, width), lambda i: (0, 0)),    # gamma (resident)
            pl.BlockSpec((1, width), lambda i: (0, 0)),    # beta  (resident)
        ],
        out_specs=pl.BlockSpec((tm, width), lambda i: (i, 0)),
        out_shape=jax.ShapeDtypeStruct((n_rows, width), z.dtype),
        compiler_params=pltpu.CompilerParams(
            dimension_semantics=("parallel",),
            vmem_limit_bytes=48 * 1024 * 1024,   # > default scoped, < v7x 64 MiB
        ),
    )(x, g, b)

    # TODO(synk): nn.Dropout(p=0.1) is identity in eval mode; training-mode
    # dropout (pltpu.prng_seed + pltpu.stateful_bernoulli mask) is not wired in.
    return out.reshape(B, S, D)


def _reference(z, gamma, beta, eps=1e-5):
    z32 = z.astype(jnp.float32)
    mean = jnp.mean(z32, axis=-1, keepdims=True)
    var = jnp.mean((z32 - mean) ** 2, axis=-1, keepdims=True)
    return ((z32 - mean) * jax.lax.rsqrt(var + eps)
            * gamma.astype(jnp.float32) + beta.astype(jnp.float32))


if __name__ == "__main__":
    B, S, D = 2, 8, 32   # (batch, sequence, embedding); D even per the spec

    key = jax.random.PRNGKey(0)
    k0, k1, k2 = jax.random.split(key, 3)

    Z = jax.random.normal(k0, (B, S, D), jnp.float32)
    gamma = 1.0 + 0.1 * jax.random.normal(k1, (D,), jnp.float32)
    beta = 0.1 * jax.random.normal(k2, (D,), jnp.float32)

    # 1) f32, small D (exercises the lane-packed P=4 path).
    out = layer_normalization(Z, gamma, beta)
    jax.block_until_ready(out)
    ref = _reference(Z, gamma, beta)
    assert out.shape == (B, S, D) and out.dtype == jnp.float32
    assert jnp.allclose(out, ref, rtol=1e-5, atol=1e-5)

    # 2) bf16 in -> bf16 out (f32 math inside the kernel).
    Zb = Z.astype(jnp.bfloat16)
    gb = gamma.astype(jnp.bfloat16)
    bb = beta.astype(jnp.bfloat16)
    out_b = layer_normalization(Zb, gb, bb)
    jax.block_until_ready(out_b)
    ref_b = _reference(Zb, gb, bb)
    assert out_b.dtype == jnp.bfloat16
    assert jnp.allclose(out_b.astype(jnp.float32), ref_b, rtol=5e-2, atol=5e-2)

    # 3) f32, D multiple of 128 (exercises the unpacked P=1 path).
    D2 = 128
    Z2 = jax.random.normal(k0, (B, S, D2), jnp.float32)
    g2 = 1.0 + 0.1 * jax.random.normal(k1, (D2,), jnp.float32)
    b2 = 0.1 * jax.random.normal(k2, (D2,), jnp.float32)
    out2 = layer_normalization(Z2, g2, b2)
    jax.block_until_ready(out2)
    assert jnp.allclose(out2, _reference(Z2, g2, b2), rtol=1e-5, atol=1e-5)

    print("KERNEL_OK")
</pallas_src>

<mosaic_0001>
module attributes {stable_mosaic.version = 11 : i64} {
  func.func @_layer_norm_kernel(%arg0: i32, %arg1: memref<4x128xf32, #tpu.memory_space<vmem>>, %arg2: memref<1x128xf32, #tpu.memory_space<vmem>>, %arg3: memref<1x128xf32, #tpu.memory_space<vmem>>, %arg4: memref<4x128xf32, #tpu.memory_space<vmem>>) attributes {dimension_semantics = [#tpu.dimension_semantics<parallel>], iteration_bounds = array<i64: 1>, scalar_prefetch = 0 : i64, scratch_operands = 0 : i64, tpu.core_type = #tpu.core_type<tc>, window_params = [{transform_indices = @transform_0, window_bounds = array<i64: 4, 128>}, {pipeline_mode = #tpu.pipeline_mode<synchronous>, transform_indices = @transform_1, window_bounds = array<i64: 1, 128>}, {pipeline_mode = #tpu.pipeline_mode<synchronous>, transform_indices = @transform_2, window_bounds = array<i64: 1, 128>}, {transform_indices = @transform_3, window_bounds = array<i64: 4, 128>}]} {
    %c0 = arith.constant 0 : index
    %c0_0 = arith.constant 0 : index
    %0 = vector.load %arg1[%c0, %c0_0] : memref<4x128xf32, #tpu.memory_space<vmem>>, vector<4x128xf32>
    %c0_1 = arith.constant 0 : index
    %c0_2 = arith.constant 0 : index
    %1 = vector.load %arg2[%c0_1, %c0_2] : memref<1x128xf32, #tpu.memory_space<vmem>>, vector<1x128xf32>
    %c0_3 = arith.constant 0 : index
    %c0_4 = arith.constant 0 : index
    %2 = vector.load %arg3[%c0_3, %c0_4] : memref<1x128xf32, #tpu.memory_space<vmem>>, vector<1x128xf32>
    %3 = vector.extract_strided_slice %0 {offsets = [0, 0], sizes = [4, 32], strides = [1, 1]} : vector<4x128xf32> to vector<4x32xf32>
    %cst = arith.constant dense<0.000000e+00> : vector<4xf32>
    %4 = vector.multi_reduction <add>, %3, %cst [1] : vector<4x32xf32> to vector<4xf32>
    %5 = vector.shape_cast %4 : vector<4xf32> to vector<4x1xf32>
    %cst_5 = arith.constant 3.200000e+01 : f32
    %6 = vector.broadcast %cst_5 : f32 to vector<4x1xf32>
    %7 = arith.divf %5, %6 : vector<4x1xf32>
    %8 = vector.broadcast %7 : vector<4x1xf32> to vector<4x32xf32>
    %9 = arith.subf %3, %8 : vector<4x32xf32>
    %10 = arith.mulf %9, %9 : vector<4x32xf32>
    %cst_6 = arith.constant dense<0.000000e+00> : vector<4xf32>
    %11 = vector.multi_reduction <add>, %10, %cst_6 [1] : vector<4x32xf32> to vector<4xf32>
    %12 = vector.shape_cast %11 : vector<4xf32> to vector<4x1xf32>
    %cst_7 = arith.constant 3.200000e+01 : f32
    %13 = vector.broadcast %cst_7 : f32 to vector<4x1xf32>
    %14 = arith.divf %12, %13 : vector<4x1xf32>
    %cst_8 = arith.constant 9.99999974E-6 : f32
    %15 = vector.broadcast %cst_8 : f32 to vector<4x1xf32>
    %16 = arith.addf %14, %15 : vector<4x1xf32>
    %17 = math.rsqrt %16 : vector<4x1xf32>
    %18 = vector.broadcast %17 : vector<4x1xf32> to vector<4x32xf32>
    %19 = arith.mulf %9, %18 : vector<4x32xf32>
    %20 = vector.extract_strided_slice %0 {offsets = [0, 32], sizes = [4, 32], strides = [1, 1]} : vector<4x128xf32> to vector<4x32xf32>
    %cst_9 = arith.constant dense<0.000000e+00> : vector<4xf32>
    %21 = vector.multi_reduction <add>, %20, %cst_9 [1] : vector<4x32xf32> to vector<4xf32>
    %22 = vector.shape_cast %21 : vector<4xf32> to vector<4x1xf32>
    %cst_10 = arith.constant 3.200000e+01 : f32
    %23 = vector.broadcast %cst_10 : f32 to vector<4x1xf32>
    %24 = arith.divf %22, %23 : vector<4x1xf32>
    %25 = vector.broadcast %24 : vector<4x1xf32> to vector<4x32xf32>
    %26 = arith.subf %20, %25 : vector<4x32xf32>
    %27 = arith.mulf %26, %26 : vector<4x32xf32>
    %cst_11 = arith.constant dense<0.000000e+00> : vector<4xf32>
    %28 = vector.multi_reduction <add>, %27, %cst_11 [1] : vector<4x32xf32> to vector<4xf32>
    %29 = vector.shape_cast %28 : vector<4xf32> to vector<4x1xf32>
    %cst_12 = arith.constant 3.200000e+01 : f32
    %30 = vector.broadcast %cst_12 : f32 to vector<4x1xf32>
    %31 = arith.divf %29, %30 : vector<4x1xf32>
    %cst_13 = arith.constant 9.99999974E-6 : f32
    %32 = vector.broadcast %cst_13 : f32 to vector<4x1xf32>
    %33 = arith.addf %31, %32 : vector<4x1xf32>
    %34 = math.rsqrt %33 : vector<4x1xf32>
    %35 = vector.broadcast %34 : vector<4x1xf32> to vector<4x32xf32>
    %36 = arith.mulf %26, %35 : vector<4x32xf32>
    %37 = vector.extract_strided_slice %0 {offsets = [0, 64], sizes = [4, 32], strides = [1, 1]} : vector<4x128xf32> to vector<4x32xf32>
    %cst_14 = arith.constant dense<0.000000e+00> : vector<4xf32>
    %38 = vector.multi_reduction <add>, %37, %cst_14 [1] : vector<4x32xf32> to vector<4xf32>
    %39 = vector.shape_cast %38 : vector<4xf32> to vector<4x1xf32>
    %cst_15 = arith.constant 3.200000e+01 : f32
    %40 = vector.broadcast %cst_15 : f32 to vector<4x1xf32>
    %41 = arith.divf %39, %40 : vector<4x1xf32>
    %42 = vector.broadcast %41 : vector<4x1xf32> to vector<4x32xf32>
    %43 = arith.subf %37, %42 : vector<4x32xf32>
    %44 = arith.mulf %43, %43 : vector<4x32xf32>
    %cst_16 = arith.constant dense<0.000000e+00> : vector<4xf32>
    %45 = vector.multi_reduction <add>, %44, %cst_16 [1] : vector<4x32xf32> to vector<4xf32>
    %46 = vector.shape_cast %45 : vector<4xf32> to vector<4x1xf32>
    %cst_17 = arith.constant 3.200000e+01 : f32
    %47 = vector.broadcast %cst_17 : f32 to vector<4x1xf32>
    %48 = arith.divf %46, %47 : vector<4x1xf32>
    %cst_18 = arith.constant 9.99999974E-6 : f32
    %49 = vector.broadcast %cst_18 : f32 to vector<4x1xf32>
    %50 = arith.addf %48, %49 : vector<4x1xf32>
    %51 = math.rsqrt %50 : vector<4x1xf32>
    %52 = vector.broadcast %51 : vector<4x1xf32> to vector<4x32xf32>
    %53 = arith.mulf %43, %52 : vector<4x32xf32>
    %54 = vector.extract_strided_slice %0 {offsets = [0, 96], sizes = [4, 32], strides = [1, 1]} : vector<4x128xf32> to vector<4x32xf32>
    %cst_19 = arith.constant dense<0.000000e+00> : vector<4xf32>
    %55 = vector.multi_reduction <add>, %54, %cst_19 [1] : vector<4x32xf32> to vector<4xf32>
    %56 = vector.shape_cast %55 : vector<4xf32> to vector<4x1xf32>
    %cst_20 = arith.constant 3.200000e+01 : f32
    %57 = vector.broadcast %cst_20 : f32 to vector<4x1xf32>
    %58 = arith.divf %56, %57 : vector<4x1xf32>
    %59 = vector.broadcast %58 : vector<4x1xf32> to vector<4x32xf32>
    %60 = arith.subf %54, %59 : vector<4x32xf32>
    %61 = arith.mulf %60, %60 : vector<4x32xf32>
    %cst_21 = arith.constant dense<0.000000e+00> : vector<4xf32>
    %62 = vector.multi_reduction <add>, %61, %cst_21 [1] : vector<4x32xf32> to vector<4xf32>
    %63 = vector.shape_cast %62 : vector<4xf32> to vector<4x1xf32>
    %cst_22 = arith.constant 3.200000e+01 : f32
    %64 = vector.broadcast %cst_22 : f32 to vector<4x1xf32>
    %65 = arith.divf %63, %64 : vector<4x1xf32>
    %cst_23 = arith.constant 9.99999974E-6 : f32
    %66 = vector.broadcast %cst_23 : f32 to vector<4x1xf32>
    %67 = arith.addf %65, %66 : vector<4x1xf32>
    %68 = math.rsqrt %67 : vector<4x1xf32>
    %69 = vector.broadcast %68 : vector<4x1xf32> to vector<4x32xf32>
    %70 = arith.mulf %60, %69 : vector<4x32xf32>
    %71 = tpu.concatenate %19, %36, %53, %70 in 1 : vector<4x32xf32>, vector<4x32xf32>, vector<4x32xf32>, vector<4x32xf32> -> vector<4x128xf32>
    %72 = vector.broadcast %1 : vector<1x128xf32> to vector<4x128xf32>
    %73 = arith.mulf %71, %72 : vector<4x128xf32>
    %74 = vector.broadcast %2 : vector<1x128xf32> to vector<4x128xf32>
    %75 = arith.addf %73, %74 : vector<4x128xf32>
    %c0_24 = arith.constant 0 : index
    %c0_25 = arith.constant 0 : index
    %76 = vector.load %arg4[%c0_24, %c0_25] : memref<4x128xf32, #tpu.memory_space<vmem>>, vector<4x128xf32>
    tpu.vector_store %arg4[%c0_24, %c0_25], %75 {strides = array<i32>} : memref<4x128xf32, #tpu.memory_space<vmem>>, vector<4x128xf32>,
    return
  }
  func.func @transform_0(%arg0: i32) -> (i32, i32) {
    %c0_i32 = arith.constant 0 : i32
    %c0_i32_0 = arith.constant 0 : i32
    return %arg0, %c0_i32 : i32, i32
  }
  func.func @transform_1(%arg0: i32) -> (i32, i32) {
    %c0_i32 = arith.constant 0 : i32
    %c0_i32_0 = arith.constant 0 : i32
    %c0_i32_1 = arith.constant 0 : i32
    return %c0_i32, %c0_i32_0 : i32, i32
  }
  func.func @transform_2(%arg0: i32) -> (i32, i32) {
    %c0_i32 = arith.constant 0 : i32
    %c0_i32_0 = arith.constant 0 : i32
    %c0_i32_1 = arith.constant 0 : i32
    return %c0_i32, %c0_i32_0 : i32, i32
  }
  func.func @transform_3(%arg0: i32) -> (i32, i32) {
    %c0_i32 = arith.constant 0 : i32
    %c0_i32_0 = arith.constant 0 : i32
    return %arg0, %c0_i32 : i32, i32
  }
}

</mosaic_0001>

<llo_original>
// kernel: tpu_custom_call.1
$region0: #{tpu_custom_call.1}
  #allocation0 [shape = 'u32[]', space=smem, size = 0x4, offset = 0x4, fixed_abs, tag = 'smem constant byte address 0x4 - core index']
  #allocation1 [shape = 'u32[144,128]{1,0:T(1,128)}', space=vmem, size = 0x12000, scoped, tag = 'internal scratch']
  %s0 = inlined_call_operand.hbm [shape: f32[4,128], index: 0, kind: input, shape index: {}]
  %s1 = inlined_call_operand.vmem [shape: f32[1,128], index: 1, kind: input, shape index: {}]
  %s2 = inlined_call_operand.vmem [shape: f32[1,128], index: 2, kind: input, shape index: {}]
  %s3 = inlined_call_operand.hbm [shape: f32[4,128], index: 3, kind: output, shape index: {}]
  %s4 = sld [smem:[#allocation0]]
  $region26: #{tpu_custom_call.1} parent=0
    _
  %s6 = ssub.s32 1, %s4
  %s7 = scalar_select 0, %s6, %s4
  $region1: #{tpu_custom_call.1} parent=0
    #allocation2 [shape = 'u8[2048]{0}', space=vmem, size = 0x800, scoped, tag = 'input window, operand 0, single buffered']
    #allocation3 [shape = 's32[1]{0}', space=sflag, size = 0x4, scoped, tag = 'scoped memory for tpu_custom_call.1']
    #allocation4 [shape = 's32[1]{0}', space=sflag, size = 0x4, scoped, tag = 'scoped memory for tpu_custom_call.1']
    #allocation5 [shape = 'u8[2048]{0}', space=vmem, size = 0x800, scoped, tag = 'output window, operand 0, single buffered']
    %8 = vsyncpa [#allocation3], 0
    %9 = vsyncpa [#allocation4], 0
    // Predicated region
    $region2: #{tpu_custom_call.1} parent=1 // pred_check
      _
    $region3: #{tpu_custom_call.1} parent=1 // pred_check_branch
      %11 = sbr.rel (0) target = $region5
    $region4: #{tpu_custom_call.1} parent=1 // pred_region
      %s13 = ssub.s32 64, 64
      %14 = vsyncadd [#allocation3], %s13
      %s16 = sshll.u32 [#allocation2], 4
      %s17 = int_to_ptr.vmem [resolvable:$true] %s16
      %19 = dma.hbm_to_vmem [thread:$0]  %s0, 64, %s17, [#allocation3]
    $region5: #{tpu_custom_call.1} parent=1 // pred_fallthru
      _
    // Predicated region
    $region6: #{tpu_custom_call.1} parent=1 // pred_check
      _
    $region7: #{tpu_custom_call.1} parent=1 // pred_check_branch
      %21 = sbr.rel (0) target = $region9
    $region8: #{tpu_custom_call.1} parent=1 // pred_region
      _
    $region9: #{tpu_custom_call.1} parent=1 // pred_fallthru
      _
    // Predicated region
    $region10: #{tpu_custom_call.1} parent=1 // pred_check
      _
    $region11: #{tpu_custom_call.1} parent=1 // pred_check_branch
      %23 = sbr.rel (0) target = $region13
    $region12: #{tpu_custom_call.1} parent=1 // pred_region
      _
    $region13: #{tpu_custom_call.1} parent=1 // pred_fallthru
      _
    // Predicated region
    $region14: #{tpu_custom_call.1} parent=1 // pred_check
      _
    $region15: #{tpu_custom_call.1} parent=1 // pred_check_branch
      %25 = sbr.rel (0) target = $region17
    $region16: #{tpu_custom_call.1} parent=1 // pred_region
      %26 = dma.done [#allocation3], 64
    $region17: #{tpu_custom_call.1} parent=1 // pred_fallthru
      _
    %v27 = vld [vmem:[#allocation2] sm:$0xf]
    %v28 = vld [vmem:[%s1] sm:$0x1]
    %v29 = vld [vmem:[%s2] sm:$0x1]
    %vm30 = vcmask 257024
    %v31 = vsel %vm30, %v27, 0.0
    %32 = vadd.xlane.f32.xlu0 %v31
    %v33 = vpop.xlane.xlu0 %32
    %v34 = vrcp.pop 32.0
    %v35 = vmul.f32 %v33, %v34
    %v36 = vsub.f32 %v27, %v35
    %v37 = vmul.f32 %v36, %v36
    %v38 = vsel %vm30, %v37, 0.0
    %39 = vadd.xlane.f32.xlu0 %v38
    %v40 = vpop.xlane.xlu0 %39
    %v41 = vmul.f32 %v40, %v34
    %v42 = vadd.f32 %v41, 1e-05
    %v43 = vrsqrt.pop %v42
    %v44 = vmul.f32 %v36, %v43
    %46 = vrot.lane.b32.xlu0 %v27, 96
    %v47 = vpop.permute.xlu0 %46
    %v49 = vsel %vm30, %v47, 0.0
    %50 = vadd.xlane.f32.xlu0 %v49
    %v51 = vpop.xlane.xlu0 %50
    %v52 = vmul.f32 %v51, %v34
    %v53 = vsub.f32 %v27, %v52
    %v54 = vmul.f32 %v53, %v53
    %56 = vrot.lane.b32.xlu0 %v54, 96
    %v57 = vpop.permute.xlu0 %56
    %v59 = vsel %vm30, %v57, 0.0
    %60 = vadd.xlane.f32.xlu0 %v59
    %v61 = vpop.xlane.xlu0 %60
    %v62 = vmul.f32 %v61, %v34
    %v63 = vadd.f32 %v62, 1e-05
    %v64 = vrsqrt.pop %v63
    %v65 = vmul.f32 %v53, %v64
    %66 = vrot.lane.b32.xlu0 %v27, 64
    %v67 = vpop.permute.xlu0 %66
    %v69 = vsel %vm30, %v67, 0.0
    %70 = vadd.xlane.f32.xlu0 %v69
    %v71 = vpop.xlane.xlu0 %70
    %v72 = vmul.f32 %v71, %v34
    %v73 = vsub.f32 %v27, %v72
    %v74 = vmul.f32 %v73, %v73
    %76 = vrot.lane.b32.xlu0 %v74, 64
    %v77 = vpop.permute.xlu0 %76
    %v79 = vsel %vm30, %v77, 0.0
    %80 = vadd.xlane.f32.xlu0 %v79
    %v81 = vpop.xlane.xlu0 %80
    %v82 = vmul.f32 %v81, %v34
    %v83 = vadd.f32 %v82, 1e-05
    %v84 = vrsqrt.pop %v83
    %v85 = vmul.f32 %v73, %v84
    %86 = vrot.lane.b32.xlu0 %v27, 32
    %v87 = vpop.permute.xlu0 %86
    %v89 = vsel %vm30, %v87, 0.0
    %90 = vadd.xlane.f32.xlu0 %v89
    %v91 = vpop.xlane.xlu0 %90
    %v92 = vmul.f32 %v91, %v34
    %v93 = vsub.f32 %v27, %v92
    %v94 = vmul.f32 %v93, %v93
    %96 = vrot.lane.b32.xlu0 %v94, 32
    %v97 = vpop.permute.xlu0 %96
    %v99 = vsel %vm30, %v97, 0.0
    %100 = vadd.xlane.f32.xlu0 %v99
    %v101 = vpop.xlane.xlu0 %100
    %v102 = vmul.f32 %v101, %v34
    %v103 = vadd.f32 %v102, 1e-05
    %v104 = vrsqrt.pop %v103
    %v105 = vmul.f32 %v93, %v104
    %vm106 = vcmask 261120
    %v107 = vsel %vm106, %v44, %v65
    %vm108 = vcmask 523264
    %v109 = vsel %vm108, %v107, %v85
    %vm110 = vcmask 785408
    %v111 = vsel %vm110, %v109, %v105
    %v113 = vlaneseq
    %v114 = vshrl.u32 %v113, 7
    %v115 = vsub.s32 0, %v114
    %v116 = vrot.slane %v28, %v115
    %v118 = vmul.f32 %v111, %v116
    %v120 = vlaneseq
    %v121 = vshrl.u32 %v120, 7
    %v122 = vsub.s32 0, %v121
    %v123 = vrot.slane %v29, %v122
    %v125 = vadd.f32 %v118, %v123
    %126 = vst [vmem:[#allocation5] sm:$0xf] %v125
    // Predicated region
    $region18: #{tpu_custom_call.1} parent=1 // pred_check
      _
    $region19: #{tpu_custom_call.1} parent=1 // pred_check_branch
      %128 = sbr.rel (0) target = $region21
    $region20: #{tpu_custom_call.1} parent=1 // pred_region
      %s130 = ssub.s32 64, 64
      %131 = vsyncadd [#allocation4], %s130
      %s133 = sshll.u32 [#allocation5], 4
      %s134 = int_to_ptr.vmem [resolvable:$true] %s133
      %136 = dma.vmem_to_hbm [thread:$0]  %s134, 64, %s3, [#allocation4]
    $region21: #{tpu_custom_call.1} parent=1 // pred_fallthru
      _
    // Predicated region
    $region22: #{tpu_custom_call.1} parent=1 // pred_check
      _
    $region23: #{tpu_custom_call.1} parent=1 // pred_check_branch
      %138 = sbr.rel (0) target = $region25
    $region24: #{tpu_custom_call.1} parent=1 // pred_region
      %139 = dma.done [#allocation4], 64
    $region25: #{tpu_custom_call.1} parent=1 // pred_fallthru
      _
    %140 = vsyncpa [#allocation3], 1
    %141 = vsyncpa [#allocation4], 1

</llo_original>
